<compile_context>
chip_gen: v7x
topology: tpu7x:2x2x1
jax: 0.10.0
libtpu: 0.0.40
codegen_flags: <defaults>
</compile_context>

<pallas_src>
import jax
import jax.numpy as jnp
from jax.experimental import pallas as pl
from jax.experimental.pallas import tpu as pltpu


# ----------------------------- in-kernel math ------------------------------ #

def _leaky_relu(h, slope=0.01):
    # F.leaky_relu default negative_slope = 0.01
    return jnp.where(h > 0, h, slope * h)


def _layer_norm_all_onepass(h, eps=1e-5):
    # F.layer_norm(x, x.size()): normalize over EVERY element (batch included),
    # biased variance, no affine params.  Single-pass stats: the two reductions
    # are independent and overlap in the XLU instead of serializing.
    n = h.size  # static
    s1 = jnp.sum(h)
    s2 = jnp.sum(h * h)
    mu = s1 / n
    var = jnp.maximum(s2 / n - mu * mu, 0.0)
    return (h - mu) * jax.lax.rsqrt(var + eps)


def _layer_norm_all_twopass(h, eps=1e-5):
    # Reference-only (mirrors PyTorch's two-pass formulation).
    mu = jnp.mean(h)
    var = jnp.mean((h - mu) ** 2)
    return (h - mu) * jax.lax.rsqrt(var + eps)


# --------------------------------- kernel ---------------------------------- #

def softq_kernel(x_ref, a_ref, w1x_ref, w1a_ref, b1_ref,
                 w2_ref, b2_ref, w3_ref, b3_ref, o_ref):
    # fc1 with the feature-concat fused:  [x | a] @ W1  ==  x @ W1x + a @ W1a
    h = (
        jnp.dot(x_ref[...], w1x_ref[0], preferred_element_type=jnp.float32)
        + jnp.dot(a_ref[...], w1a_ref[0], preferred_element_type=jnp.float32)
        + b1_ref[0]
    )
    h = _leaky_relu(_layer_norm_all_onepass(h))

    # fc2 -> full-tensor layer-norm -> leaky-relu (bf16 MXU, f32 accumulate)
    h = jnp.dot(h.astype(w2_ref.dtype), w2_ref[0],
                preferred_element_type=jnp.float32) + b2_ref[0]
    h = _leaky_relu(_layer_norm_all_onepass(h))

    # fc3
    q = jnp.dot(h.astype(w3_ref.dtype), w3_ref[0],
                preferred_element_type=jnp.float32) + b3_ref[0]
    o_ref[0] = q.astype(o_ref.dtype)


# -------------------------------- wrappers --------------------------------- #

def init_params(key, n_obs=11, n_actions=3, hidden_size=128):
    # nn.Linear default init: U(-1/sqrt(fan_in), +1/sqrt(fan_in)) for W and b.
    d_in = n_obs + n_actions
    ks = jax.random.split(key, 6)

    def lin(kw, kb, fan_in, fan_out):
        bound = 1.0 / float(fan_in) ** 0.5
        w = jax.random.uniform(kw, (fan_in, fan_out), jnp.float32, -bound, bound)
        b = jax.random.uniform(kb, (1, fan_out), jnp.float32, -bound, bound)
        return w, b

    w1, b1 = lin(ks[0], ks[1], d_in, hidden_size)
    w2, b2 = lin(ks[2], ks[3], hidden_size, hidden_size)
    w3, b3 = lin(ks[4], ks[5], hidden_size, 1)
    return (w1, b1, w2, b2, w3, b3)


def prepare_params(critic_param_list, n_obs, weight_dtype=jnp.bfloat16):
    """Stack per-critic params on a leading axis, split W1 once for the fused
    concat, and store matmul weights in bf16 (biases stay f32)."""
    w1 = jnp.stack([p[0] for p in critic_param_list])   # (C, n_obs+n_act, H)
    b1 = jnp.stack([p[1] for p in critic_param_list])   # (C, 1, H)
    w2 = jnp.stack([p[2] for p in critic_param_list])   # (C, H, H)
    b2 = jnp.stack([p[3] for p in critic_param_list])   # (C, 1, H)
    w3 = jnp.stack([p[4] for p in critic_param_list])   # (C, H, 1)
    b3 = jnp.stack([p[5] for p in critic_param_list])   # (C, 1, 1)
    w1x = w1[:, :n_obs, :].astype(weight_dtype)
    w1a = w1[:, n_obs:, :].astype(weight_dtype)
    return (w1x, w1a, b1, w2.astype(weight_dtype), b2, w3.astype(weight_dtype), b3)


@jax.jit
def softq_forward(x, a, packed):
    """Fused forward for all stacked critics. Returns (n_critics, B, 1) f32."""
    w1x, w1a, b1, w2, b2, w3, b3 = packed
    C, n_obs, H = w1x.shape
    n_act = w1a.shape[1]
    B = x.shape[0]

    compute_dtype = w1x.dtype
    x = x.astype(compute_dtype)
    a = a.astype(compute_dtype)

    grid_spec = pltpu.PrefetchScalarGridSpec(
        num_scalar_prefetch=0,
        grid=(C,),
        in_specs=[
            # x / a: same block every grid step -> DMA'd once, stays resident.
            pl.BlockSpec((B, n_obs), lambda c: (0, 0)),
            pl.BlockSpec((B, n_act), lambda c: (0, 0)),
            # per-critic weights / biases
            pl.BlockSpec((1, n_obs, H), lambda c: (c, 0, 0)),
            pl.BlockSpec((1, n_act, H), lambda c: (c, 0, 0)),
            pl.BlockSpec((1, 1, H), lambda c: (c, 0, 0)),
            pl.BlockSpec((1, H, H), lambda c: (c, 0, 0)),
            pl.BlockSpec((1, 1, H), lambda c: (c, 0, 0)),
            pl.BlockSpec((1, H, 1), lambda c: (c, 0, 0)),
            pl.BlockSpec((1, 1, 1), lambda c: (c, 0, 0)),
        ],
        out_specs=pl.BlockSpec((1, B, 1), lambda c: (c, 0, 0)),
    )

    return pl.pallas_call(
        softq_kernel,
        out_shape=jax.ShapeDtypeStruct((C, B, 1), jnp.float32),
        grid_spec=grid_spec,
        compiler_params=pltpu.CompilerParams(
            # critics are independent -> allow megacore split on v7x
            dimension_semantics=("parallel",),
            # explicit VMEM budget (well within v5e/v6e/v7x scoped defaults)
            vmem_limit_bytes=32 * 1024 * 1024,
        ),
    )(x, a, w1x, w1a, b1, w2, b2, w3, b3)


# ------------------------------- references -------------------------------- #

def softq_ref_f32(x, a, params):
    # Faithful f32 replica of the PyTorch module.
    w1, b1, w2, b2, w3, b3 = params
    h = jnp.concatenate([x, a], axis=1) @ w1 + b1
    h = _leaky_relu(_layer_norm_all_twopass(h))
    h = h @ w2 + b2
    h = _leaky_relu(_layer_norm_all_twopass(h))
    return h @ w3 + b3


def softq_ref_mixed(x, a, params, n_obs, dtype=jnp.bfloat16):
    # Mirrors the kernel's mixed precision exactly (bf16 MXU inputs, f32 acc).
    w1, b1, w2, b2, w3, b3 = params
    w1x = w1[:n_obs].astype(dtype)
    w1a = w1[n_obs:].astype(dtype)
    h = (jnp.dot(x.astype(dtype), w1x, preferred_element_type=jnp.float32)
         + jnp.dot(a.astype(dtype), w1a, preferred_element_type=jnp.float32) + b1)
    h = _leaky_relu(_layer_norm_all_onepass(h))
    h = jnp.dot(h.astype(dtype), w2.astype(dtype),
                preferred_element_type=jnp.float32) + b2
    h = _leaky_relu(_layer_norm_all_onepass(h))
    return jnp.dot(h.astype(dtype), w3.astype(dtype),
                   preferred_element_type=jnp.float32) + b3


# ----------------------------------- main ----------------------------------- #

if __name__ == "__main__":
    key = jax.random.PRNGKey(0)
    k_q1, k_q2, k_x, k_a = jax.random.split(key, 4)

    n_obs, n_actions, hidden_size, batch = 11, 3, 128, 4

    # Twin SAC critics, fused into a single pallas_call.
    qf1_params = init_params(k_q1, n_obs, n_actions, hidden_size)
    qf2_params = init_params(k_q2, n_obs, n_actions, hidden_size)
    packed = prepare_params([qf1_params, qf2_params], n_obs)

    x = jax.random.normal(k_x, (batch, n_obs), jnp.float32)
    a = jax.random.normal(k_a, (batch, n_actions), jnp.float32)

    out = jax.block_until_ready(softq_forward(x, a, packed))   # (2, B, 1)
    assert out.shape == (2, batch, 1)

    # Tight check vs. a reference that mirrors the kernel's precision choices.
    mref1 = softq_ref_mixed(x, a, qf1_params, n_obs)
    mref2 = softq_ref_mixed(x, a, qf2_params, n_obs)
    assert jnp.allclose(out[0], mref1, atol=2e-3, rtol=2e-3)
    assert jnp.allclose(out[1], mref2, atol=2e-3, rtol=2e-3)

    # Loose sanity check vs. the faithful f32 PyTorch-equivalent reference
    # (difference is purely the intended bf16 matmul quantization).
    fref1 = softq_ref_f32(x, a, qf1_params)
    fref2 = softq_ref_f32(x, a, qf2_params)
    assert jnp.allclose(out[0], fref1, atol=1e-1, rtol=1e-1)
    assert jnp.allclose(out[1], fref2, atol=1e-1, rtol=1e-1)

    print("KERNEL_OK")
</pallas_src>

<mosaic_0001>
module attributes {stable_mosaic.version = 11 : i64} {
  func.func @softq_kernel(%arg0: i32, %arg1: memref<4x11xbf16, #tpu.memory_space<vmem>>, %arg2: memref<4x3xbf16, #tpu.memory_space<vmem>>, %arg3: memref<1x11x128xbf16, #tpu.memory_space<vmem>>, %arg4: memref<1x3x128xbf16, #tpu.memory_space<vmem>>, %arg5: memref<1x1x128xf32, #tpu.memory_space<vmem>>, %arg6: memref<1x128x128xbf16, #tpu.memory_space<vmem>>, %arg7: memref<1x1x128xf32, #tpu.memory_space<vmem>>, %arg8: memref<1x128x1xbf16, #tpu.memory_space<vmem>>, %arg9: memref<1x1x1xf32, #tpu.memory_space<vmem>>, %arg10: memref<1x4x1xf32, #tpu.memory_space<vmem>>) attributes {dimension_semantics = [#tpu.dimension_semantics<parallel>], iteration_bounds = array<i64: 2>, scalar_prefetch = 0 : i64, scratch_operands = 0 : i64, tpu.core_type = #tpu.core_type<tc>, window_params = [{pipeline_mode = #tpu.pipeline_mode<synchronous>, transform_indices = @transform_0, window_bounds = array<i64: 4, 11>}, {pipeline_mode = #tpu.pipeline_mode<synchronous>, transform_indices = @transform_1, window_bounds = array<i64: 4, 3>}, {transform_indices = @transform_2, window_bounds = array<i64: 1, 11, 128>}, {transform_indices = @transform_3, window_bounds = array<i64: 1, 3, 128>}, {transform_indices = @transform_4, window_bounds = array<i64: 1, 1, 128>}, {transform_indices = @transform_5, window_bounds = array<i64: 1, 128, 128>}, {transform_indices = @transform_6, window_bounds = array<i64: 1, 1, 128>}, {transform_indices = @transform_7, window_bounds = array<i64: 1, 128, 1>}, {transform_indices = @transform_8, window_bounds = array<i64: 1, 1, 1>}, {transform_indices = @transform_9, window_bounds = array<i64: 1, 4, 1>}]} {
    %c0 = arith.constant 0 : index
    %c0_0 = arith.constant 0 : index
    %0 = vector.load %arg1[%c0, %c0_0] : memref<4x11xbf16, #tpu.memory_space<vmem>>, vector<4x11xbf16>
    %c0_1 = arith.constant 0 : index
    %c0_2 = arith.constant 0 : index
    %c0_3 = arith.constant 0 : index
    %1 = vector.load %arg3[%c0_1, %c0_2, %c0_3] : memref<1x11x128xbf16, #tpu.memory_space<vmem>>, vector<1x11x128xbf16>
    %2 = vector.shape_cast %1 : vector<1x11x128xbf16> to vector<11x128xbf16>
    %cst = arith.constant dense<0.000000e+00> : vector<4x128xf32>
    %3 = tpu.matmul %0, %2, %cst {dimension_numbers = #tpu.dot_dimension_numbers<[1], [0], [0], [1], [0, 0, 1, 1], [], []>} : vector<4x11xbf16>, vector<11x128xbf16>, vector<4x128xf32> -> vector<4x128xf32>
    %c0_4 = arith.constant 0 : index
    %c0_5 = arith.constant 0 : index
    %4 = vector.load %arg2[%c0_4, %c0_5] : memref<4x3xbf16, #tpu.memory_space<vmem>>, vector<4x3xbf16>
    %c0_6 = arith.constant 0 : index
    %c0_7 = arith.constant 0 : index
    %c0_8 = arith.constant 0 : index
    %5 = vector.load %arg4[%c0_6, %c0_7, %c0_8] : memref<1x3x128xbf16, #tpu.memory_space<vmem>>, vector<1x3x128xbf16>
    %6 = vector.shape_cast %5 : vector<1x3x128xbf16> to vector<3x128xbf16>
    %cst_9 = arith.constant dense<0.000000e+00> : vector<4x128xf32>
    %7 = tpu.matmul %4, %6, %cst_9 {dimension_numbers = #tpu.dot_dimension_numbers<[1], [0], [0], [1], [0, 0, 1, 1], [], []>} : vector<4x3xbf16>, vector<3x128xbf16>, vector<4x128xf32> -> vector<4x128xf32>
    %8 = arith.addf %3, %7 : vector<4x128xf32>
    %c0_10 = arith.constant 0 : index
    %c0_11 = arith.constant 0 : index
    %c0_12 = arith.constant 0 : index
    %9 = vector.load %arg5[%c0_10, %c0_11, %c0_12] : memref<1x1x128xf32, #tpu.memory_space<vmem>>, vector<1x1x128xf32>
    %10 = vector.shape_cast %9 : vector<1x1x128xf32> to vector<1x128xf32>
    %11 = vector.broadcast %10 : vector<1x128xf32> to vector<4x128xf32>
    %12 = arith.addf %8, %11 : vector<4x128xf32>
    %13 = vector.shape_cast %12 : vector<4x128xf32> to vector<1x4x128xf32>
    %cst_13 = arith.constant dense<0.000000e+00> : vector<1xf32>
    %14 = vector.multi_reduction <add>, %13, %cst_13 [1, 2] : vector<1x4x128xf32> to vector<1xf32>
    %15 = vector.shape_cast %14 : vector<1xf32> to vector<1x1x1xf32>
    %16 = vector.extract %15[0, 0, 0] : f32 from vector<1x1x1xf32>
    %17 = arith.mulf %12, %12 : vector<4x128xf32>
    %18 = vector.shape_cast %17 : vector<4x128xf32> to vector<1x4x128xf32>
    %cst_14 = arith.constant dense<0.000000e+00> : vector<1xf32>
    %19 = vector.multi_reduction <add>, %18, %cst_14 [1, 2] : vector<1x4x128xf32> to vector<1xf32>
    %20 = vector.shape_cast %19 : vector<1xf32> to vector<1x1x1xf32>
    %21 = vector.extract %20[0, 0, 0] : f32 from vector<1x1x1xf32>
    %cst_15 = arith.constant 5.120000e+02 : f32
    %22 = arith.divf %16, %cst_15 : f32
    %cst_16 = arith.constant 5.120000e+02 : f32
    %23 = arith.divf %21, %cst_16 : f32
    %24 = arith.mulf %22, %22 : f32
    %25 = arith.subf %23, %24 : f32
    %cst_17 = arith.constant 0.000000e+00 : f32
    %26 = arith.maximumf %25, %cst_17 : f32
    %27 = vector.broadcast %22 : f32 to vector<4x128xf32>
    %28 = arith.subf %12, %27 : vector<4x128xf32>
    %cst_18 = arith.constant 9.99999974E-6 : f32
    %29 = arith.addf %26, %cst_18 : f32
    %30 = math.rsqrt %29 : f32
    %31 = vector.broadcast %30 : f32 to vector<4x128xf32>
    %32 = arith.mulf %28, %31 : vector<4x128xf32>
    %cst_19 = arith.constant 0.000000e+00 : f32
    %33 = vector.broadcast %cst_19 : f32 to vector<4x128xf32>
    %34 = arith.cmpf ogt, %32, %33 : vector<4x128xf32>
    %cst_20 = arith.constant 0.00999999977 : f32
    %35 = vector.broadcast %cst_20 : f32 to vector<4x128xf32>
    %36 = arith.mulf %35, %32 : vector<4x128xf32>
    %37 = arith.select %34, %32, %36 : vector<4x128xi1>, vector<4x128xf32>
    %38 = arith.truncf %37 : vector<4x128xf32> to vector<4x128xbf16>
    %c0_21 = arith.constant 0 : index
    %c0_22 = arith.constant 0 : index
    %c0_23 = arith.constant 0 : index
    %39 = vector.load %arg6[%c0_21, %c0_22, %c0_23] : memref<1x128x128xbf16, #tpu.memory_space<vmem>>, vector<1x128x128xbf16>
    %40 = vector.shape_cast %39 : vector<1x128x128xbf16> to vector<128x128xbf16>
    %cst_24 = arith.constant dense<0.000000e+00> : vector<4x128xf32>
    %41 = tpu.matmul %38, %40, %cst_24 {dimension_numbers = #tpu.dot_dimension_numbers<[1], [0], [0], [1], [0, 0, 1, 1], [], []>} : vector<4x128xbf16>, vector<128x128xbf16>, vector<4x128xf32> -> vector<4x128xf32>
    %c0_25 = arith.constant 0 : index
    %c0_26 = arith.constant 0 : index
    %c0_27 = arith.constant 0 : index
    %42 = vector.load %arg7[%c0_25, %c0_26, %c0_27] : memref<1x1x128xf32, #tpu.memory_space<vmem>>, vector<1x1x128xf32>
    %43 = vector.shape_cast %42 : vector<1x1x128xf32> to vector<1x128xf32>
    %44 = vector.broadcast %43 : vector<1x128xf32> to vector<4x128xf32>
    %45 = arith.addf %41, %44 : vector<4x128xf32>
    %46 = vector.shape_cast %45 : vector<4x128xf32> to vector<1x4x128xf32>
    %cst_28 = arith.constant dense<0.000000e+00> : vector<1xf32>
    %47 = vector.multi_reduction <add>, %46, %cst_28 [1, 2] : vector<1x4x128xf32> to vector<1xf32>
    %48 = vector.shape_cast %47 : vector<1xf32> to vector<1x1x1xf32>
    %49 = vector.extract %48[0, 0, 0] : f32 from vector<1x1x1xf32>
    %50 = arith.mulf %45, %45 : vector<4x128xf32>
    %51 = vector.shape_cast %50 : vector<4x128xf32> to vector<1x4x128xf32>
    %cst_29 = arith.constant dense<0.000000e+00> : vector<1xf32>
    %52 = vector.multi_reduction <add>, %51, %cst_29 [1, 2] : vector<1x4x128xf32> to vector<1xf32>
    %53 = vector.shape_cast %52 : vector<1xf32> to vector<1x1x1xf32>
    %54 = vector.extract %53[0, 0, 0] : f32 from vector<1x1x1xf32>
    %cst_30 = arith.constant 5.120000e+02 : f32
    %55 = arith.divf %49, %cst_30 : f32
    %cst_31 = arith.constant 5.120000e+02 : f32
    %56 = arith.divf %54, %cst_31 : f32
    %57 = arith.mulf %55, %55 : f32
    %58 = arith.subf %56, %57 : f32
    %cst_32 = arith.constant 0.000000e+00 : f32
    %59 = arith.maximumf %58, %cst_32 : f32
    %60 = vector.broadcast %55 : f32 to vector<4x128xf32>
    %61 = arith.subf %45, %60 : vector<4x128xf32>
    %cst_33 = arith.constant 9.99999974E-6 : f32
    %62 = arith.addf %59, %cst_33 : f32
    %63 = math.rsqrt %62 : f32
    %64 = vector.broadcast %63 : f32 to vector<4x128xf32>
    %65 = arith.mulf %61, %64 : vector<4x128xf32>
    %cst_34 = arith.constant 0.000000e+00 : f32
    %66 = vector.broadcast %cst_34 : f32 to vector<4x128xf32>
    %67 = arith.cmpf ogt, %65, %66 : vector<4x128xf32>
    %cst_35 = arith.constant 0.00999999977 : f32
    %68 = vector.broadcast %cst_35 : f32 to vector<4x128xf32>
    %69 = arith.mulf %68, %65 : vector<4x128xf32>
    %70 = arith.select %67, %65, %69 : vector<4x128xi1>, vector<4x128xf32>
    %71 = arith.truncf %70 : vector<4x128xf32> to vector<4x128xbf16>
    %c0_36 = arith.constant 0 : index
    %c0_37 = arith.constant 0 : index
    %c0_38 = arith.constant 0 : index
    %72 = vector.load %arg8[%c0_36, %c0_37, %c0_38] : memref<1x128x1xbf16, #tpu.memory_space<vmem>>, vector<1x128x1xbf16>
    %73 = vector.shape_cast %72 : vector<1x128x1xbf16> to vector<128x1xbf16>
    %cst_39 = arith.constant dense<0.000000e+00> : vector<4x1xf32>
    %74 = tpu.matmul %71, %73, %cst_39 {dimension_numbers = #tpu.dot_dimension_numbers<[1], [0], [0], [1], [0, 0, 1, 1], [], []>} : vector<4x128xbf16>, vector<128x1xbf16>, vector<4x1xf32> -> vector<4x1xf32>
    %c0_40 = arith.constant 0 : index
    %c0_41 = arith.constant 0 : index
    %c0_42 = arith.constant 0 : index
    %75 = vector.load %arg9[%c0_40, %c0_41, %c0_42] : memref<1x1x1xf32, #tpu.memory_space<vmem>>, vector<1x1x1xf32>
    %76 = vector.shape_cast %75 : vector<1x1x1xf32> to vector<1x1xf32>
    %77 = vector.broadcast %76 : vector<1x1xf32> to vector<4x1xf32>
    %78 = arith.addf %74, %77 : vector<4x1xf32>
    %c0_43 = arith.constant 0 : index
    %c0_44 = arith.constant 0 : index
    %c0_45 = arith.constant 0 : index
    %79 = vector.load %arg10[%c0_43, %c0_44, %c0_45] : memref<1x4x1xf32, #tpu.memory_space<vmem>>, vector<1x4x1xf32>
    %80 = vector.shape_cast %79 : vector<1x4x1xf32> to vector<4x1xf32>
    %81 = vector.shape_cast %78 : vector<4x1xf32> to vector<1x4x1xf32>
    tpu.vector_store %arg10[%c0_43, %c0_44, %c0_45], %81 {strides = array<i32>} : memref<1x4x1xf32, #tpu.memory_space<vmem>>, vector<1x4x1xf32>,
    return
  }
  func.func @transform_0(%arg0: i32) -> (i32, i32) {
    %c0_i32 = arith.constant 0 : i32
    %c0_i32_0 = arith.constant 0 : i32
    %c0_i32_1 = arith.constant 0 : i32
    return %c0_i32, %c0_i32_0 : i32, i32
  }
  func.func @transform_1(%arg0: i32) -> (i32, i32) {
    %c0_i32 = arith.constant 0 : i32
    %c0_i32_0 = arith.constant 0 : i32
    %c0_i32_1 = arith.constant 0 : i32
    return %c0_i32, %c0_i32_0 : i32, i32
  }
  func.func @transform_2(%arg0: i32) -> (i32, i32, i32) {
    %c0_i32 = arith.constant 0 : i32
    %c0_i32_0 = arith.constant 0 : i32
    %c0_i32_1 = arith.constant 0 : i32
    return %arg0, %c0_i32, %c0_i32_0 : i32, i32, i32
  }
  func.func @transform_3(%arg0: i32) -> (i32, i32, i32) {
    %c0_i32 = arith.constant 0 : i32
    %c0_i32_0 = arith.constant 0 : i32
    %c0_i32_1 = arith.constant 0 : i32
    return %arg0, %c0_i32, %c0_i32_0 : i32, i32, i32
  }
  func.func @transform_4(%arg0: i32) -> (i32, i32, i32) {
    %c0_i32 = arith.constant 0 : i32
    %c0_i32_0 = arith.constant 0 : i32
    %c0_i32_1 = arith.constant 0 : i32
    return %arg0, %c0_i32, %c0_i32_0 : i32, i32, i32
  }
  func.func @transform_5(%arg0: i32) -> (i32, i32, i32) {
    %c0_i32 = arith.constant 0 : i32
    %c0_i32_0 = arith.constant 0 : i32
    %c0_i32_1 = arith.constant 0 : i32
    return %arg0, %c0_i32, %c0_i32_0 : i32, i32, i32
  }
  func.func @transform_6(%arg0: i32) -> (i32, i32, i32) {
    %c0_i32 = arith.constant 0 : i32
    %c0_i32_0 = arith.constant 0 : i32
    %c0_i32_1 = arith.constant 0 : i32
    return %arg0, %c0_i32, %c0_i32_0 : i32, i32, i32
  }
  func.func @transform_7(%arg0: i32) -> (i32, i32, i32) {
    %c0_i32 = arith.constant 0 : i32
    %c0_i32_0 = arith.constant 0 : i32
    %c0_i32_1 = arith.constant 0 : i32
    return %arg0, %c0_i32, %c0_i32_0 : i32, i32, i32
  }
  func.func @transform_8(%arg0: i32) -> (i32, i32, i32) {
    %c0_i32 = arith.constant 0 : i32
    %c0_i32_0 = arith.constant 0 : i32
    %c0_i32_1 = arith.constant 0 : i32
    return %arg0, %c0_i32, %c0_i32_0 : i32, i32, i32
  }
  func.func @transform_9(%arg0: i32) -> (i32, i32, i32) {
    %c0_i32 = arith.constant 0 : i32
    %c0_i32_0 = arith.constant 0 : i32
    %c0_i32_1 = arith.constant 0 : i32
    return %arg0, %c0_i32, %c0_i32_0 : i32, i32, i32
  }
}

</mosaic_0001>

<llo_original>
// kernel: softq_forward.1
$region0: #{softq_forward.1}
  #allocation0 [shape = 'u32[]', space=smem, size = 0x4, offset = 0x4, fixed_abs, tag = 'smem constant byte address 0x4 - core index']
  #allocation1 [shape = 'u32[144,128]{1,0:T(1,128)}', space=vmem, size = 0x12000, scoped, tag = 'internal scratch']
  %s0 = inlined_call_operand.vmem [shape: bf16[4,11], index: 0, kind: input, shape index: {}]
  %s1 = inlined_call_operand.vmem [shape: bf16[4,3], index: 1, kind: input, shape index: {}]
  %s2 = inlined_call_operand.vmem [shape: bf16[2,11,128], index: 2, kind: input, shape index: {}]
  %s3 = inlined_call_operand.vmem [shape: bf16[2,3,128], index: 3, kind: input, shape index: {}]
  %s4 = inlined_call_operand.vmem [shape: f32[2,1,128], index: 4, kind: input, shape index: {}]
  %s5 = inlined_call_operand.vmem [shape: bf16[2,128,128], index: 5, kind: input, shape index: {}]
  %s6 = inlined_call_operand.vmem [shape: f32[2,1,128], index: 6, kind: input, shape index: {}]
  %s7 = inlined_call_operand.vmem [shape: bf16[2,128,1], index: 7, kind: input, shape index: {}]
  %s8 = inlined_call_operand.vmem [shape: f32[2,1,1], index: 8, kind: input, shape index: {}]
  %s9 = inlined_call_operand.vmem [shape: f32[2,4,1], index: 9, kind: output, shape index: {}]
  %s10 = sld [smem:[#allocation0]]
  $region69: #{softq_forward.1} parent=0
    _
  %s12 = ssub.s32 1, %s10
  %s13 = scalar_select 0, %s12, %s10
  loop: start=0, step=1, limit=4
  $region2: #{softq_forward.1} parent=0 // loop_pre_header
    _
  $region3: #{softq_forward.1} parent=0 // loop_header
    %s15 = sphi 0, %s19
    %p16 = scmp.ge.s32.totalorder %s15, 4
    %s23 = sphi 0, %s23
    %s25 = sphi 0, %s23
    %s26 = sphi 0, %s25
    %s40 = sphi 0, %s26
    %s44 = sphi 0, %s44
    %s46 = sphi 0, %s44
    %s47 = sphi 0, %s46
    %s61 = sphi 0, %s47
    %s67 = sphi 0, %s69
    %s70 = sphi 0, %s67
    %s71 = sphi 0, %s70
    %s87 = sphi 0, %s71
    %s93 = sphi 0, %s95
    %s96 = sphi 0, %s93
    %s97 = sphi 0, %s96
    %s113 = sphi 0, %s97
    %s119 = sphi 0, %s121
    %s122 = sphi 0, %s119
    %s123 = sphi 0, %s122
    %s139 = sphi 0, %s123
    %s145 = sphi 0, %s147
    %s148 = sphi 0, %s145
    %s149 = sphi 0, %s148
    %s165 = sphi 0, %s149
    %s171 = sphi 0, %s173
    %s174 = sphi 0, %s171
    %s175 = sphi 0, %s174
    %s191 = sphi 0, %s175
    %s197 = sphi 0, %s199
    %s200 = sphi 0, %s197
    %s201 = sphi 0, %s200
    %s217 = sphi 0, %s201
    %s223 = sphi 0, %s225
    %s226 = sphi 0, %s223
    %s227 = sphi 0, %s226
    %s243 = sphi 0, %s227
    %s249 = sphi 0, %s251
    %s252 = sphi 0, %s249
    %s253 = sphi 0, %s252
    %s269 = sphi 0, %s253
  $region4: #{softq_forward.1} parent=0 // loop_header_branch
    %18 = sbr.rel (%p16) target = $region8
  $region5: #{softq_forward.1} parent=0 // loop_body
    %s20 = ssub.s32 %s15, 1
    %s21 = ssub.s32 %s15, 2
    %s22 = sadd.s32 %s15, 1
    %s24 = sadd.s32 %s23, 1
    %p27 = scmp.eq.s32.totalorder %s15, 1
    %p28 = scmp.ne.s32.totalorder %s23, %s25
    %p29 = scmp.eq.s32.totalorder %s15, 0
    %p30 = por %p28, %p29
    %p31 = scmp.ne.s32.totalorder %s23, %s25
    %p32 = scmp.eq.s32.totalorder %s20, 1
    %p33 = por %p31, %p32
    %p34 = scmp.ne.s32.totalorder %s25, %s26
    %p35 = scmp.eq.s32.totalorder %s20, 0
    %p36 = por %p34, %p35
    %p37 = scmp.ne.s32.totalorder %s25, %s26
    %p38 = scmp.eq.s32.totalorder %s21, 1
    %p39 = por %p37, %p38
    %p41 = scmp.ne.s32.totalorder %s26, %s40
    %p42 = scmp.eq.s32.totalorder %s21, 0
    %p43 = por %p41, %p42
    %s45 = sadd.s32 %s44, 1
    %p48 = scmp.eq.s32.totalorder %s15, 1
    %p49 = scmp.ne.s32.totalorder %s44, %s46
    %p50 = scmp.eq.s32.totalorder %s15, 0
    %p51 = por %p49, %p50
    %p52 = scmp.ne.s32.totalorder %s44, %s46
    %p53 = scmp.eq.s32.totalorder %s20, 1
    %p54 = por %p52, %p53
    %p55 = scmp.ne.s32.totalorder %s46, %s47
    %p56 = scmp.eq.s32.totalorder %s20, 0
    %p57 = por %p55, %p56
    %p58 = scmp.ne.s32.totalorder %s46, %s47
    %p59 = scmp.eq.s32.totalorder %s21, 1
    %p60 = por %p58, %p59
    %p62 = scmp.ne.s32.totalorder %s47, %s61
    %p63 = scmp.eq.s32.totalorder %s21, 0
    %p64 = por %p62, %p63
    %s65 = ssub.s32 %s15, %s22
    %p66 = scmp.eq.s32.totalorder %s65, 0
    %s68 = sadd.s32 %s67, 1
    %s69 = scalar_select %p66, %s67, %s68
    %p72 = pneg %p66
    %p73 = scmp.eq.s32.totalorder %s15, 1
    %p74 = por %p72, %p73
    %p75 = scmp.ne.s32.totalorder %s67, %s70
    %p76 = scmp.eq.s32.totalorder %s15, 0
    %p77 = por %p75, %p76
    %p78 = scmp.ne.s32.totalorder %s67, %s70
    %p79 = scmp.eq.s32.totalorder %s20, 1
    %p80 = por %p78, %p79
    %p81 = scmp.ne.s32.totalorder %s70, %s71
    %p82 = scmp.eq.s32.totalorder %s20, 0
    %p83 = por %p81, %p82
    %p84 = scmp.ne.s32.totalorder %s70, %s71
    %p85 = scmp.eq.s32.totalorder %s21, 1
    %p86 = por %p84, %p85
    %p88 = scmp.ne.s32.totalorder %s71, %s87
    %p89 = scmp.eq.s32.totalorder %s21, 0
    %p90 = por %p88, %p89
    %s91 = ssub.s32 %s15, %s22
    %p92 = scmp.eq.s32.totalorder %s91, 0
    %s94 = sadd.s32 %s93, 1
    %s95 = scalar_select %p92, %s93, %s94
    %p98 = pneg %p92
    %p99 = scmp.eq.s32.totalorder %s15, 1
    %p100 = por %p98, %p99
    %p101 = scmp.ne.s32.totalorder %s93, %s96
    %p102 = scmp.eq.s32.totalorder %s15, 0
    %p103 = por %p101, %p102
    %p104 = scmp.ne.s32.totalorder %s93, %s96
    %p105 = scmp.eq.s32.totalorder %s20, 1
    %p106 = por %p104, %p105
    %p107 = scmp.ne.s32.totalorder %s96, %s97
    %p108 = scmp.eq.s32.totalorder %s20, 0
    %p109 = por %p107, %p108
    %p110 = scmp.ne.s32.totalorder %s96, %s97
    %p111 = scmp.eq.s32.totalorder %s21, 1
    %p112 = por %p110, %p111
    %p114 = scmp.ne.s32.totalorder %s97, %s113
    %p115 = scmp.eq.s32.totalorder %s21, 0
    %p116 = por %p114, %p115
    %s117 = ssub.s32 %s15, %s22
    %p118 = scmp.eq.s32.totalorder %s117, 0
    %s120 = sadd.s32 %s119, 1
    %s121 = scalar_select %p118, %s119, %s120
    %p124 = pneg %p118
    %p125 = scmp.eq.s32.totalorder %s15, 1
    %p126 = por %p124, %p125
    %p127 = scmp.ne.s32.totalorder %s119, %s122
    %p128 = scmp.eq.s32.totalorder %s15, 0
    %p129 = por %p127, %p128
    %p130 = scmp.ne.s32.totalorder %s119, %s122
    %p131 = scmp.eq.s32.totalorder %s20, 1
    %p132 = por %p130, %p131
    %p133 = scmp.ne.s32.totalorder %s122, %s123
    %p134 = scmp.eq.s32.totalorder %s20, 0
    %p135 = por %p133, %p134
    %p136 = scmp.ne.s32.totalorder %s122, %s123
    %p137 = scmp.eq.s32.totalorder %s21, 1
    %p138 = por %p136, %p137
    %p140 = scmp.ne.s32.totalorder %s123, %s139
    %p141 = scmp.eq.s32.totalorder %s21, 0
    %p142 = por %p140, %p141
    %s143 = ssub.s32 %s15, %s22
    %p144 = scmp.eq.s32.totalorder %s143, 0
    %s146 = sadd.s32 %s145, 1
    %s147 = scalar_select %p144, %s145, %s146
    %p150 = pneg %p144
    %p151 = scmp.eq.s32.totalorder %s15, 1
    %p152 = por %p150, %p151
    %p153 = scmp.ne.s32.totalorder %s145, %s148
    %p154 = scmp.eq.s32.totalorder %s15, 0
    %p155 = por %p153, %p154
    %p156 = scmp.ne.s32.totalorder %s145, %s148
    %p157 = scmp.eq.s32.totalorder %s20, 1
    %p158 = por %p156, %p157
    %p159 = scmp.ne.s32.totalorder %s148, %s149
    %p160 = scmp.eq.s32.totalorder %s20, 0
    %p161 = por %p159, %p160
    %p162 = scmp.ne.s32.totalorder %s148, %s149
    %p163 = scmp.eq.s32.totalorder %s21, 1
    %p164 = por %p162, %p163
    %p166 = scmp.ne.s32.totalorder %s149, %s165
    %p167 = scmp.eq.s32.totalorder %s21, 0
    %p168 = por %p166, %p167
    %s169 = ssub.s32 %s15, %s22
    %p170 = scmp.eq.s32.totalorder %s169, 0
    %s172 = sadd.s32 %s171, 1
    %s173 = scalar_select %p170, %s171, %s172
    %p176 = pneg %p170
    %p177 = scmp.eq.s32.totalorder %s15, 1
    %p178 = por %p176, %p177
    %p179 = scmp.ne.s32.totalorder %s171, %s174
    %p180 = scmp.eq.s32.totalorder %s15, 0
    %p181 = por %p179, %p180
    %p182 = scmp.ne.s32.totalorder %s171, %s174
    %p183 = scmp.eq.s32.totalorder %s20, 1
    %p184 = por %p182, %p183
    %p185 = scmp.ne.s32.totalorder %s174, %s175
    %p186 = scmp.eq.s32.totalorder %s20, 0
    %p187 = por %p185, %p186
    %p188 = scmp.ne.s32.totalorder %s174, %s175
    %p189 = scmp.eq.s32.totalorder %s21, 1
    %p190 = por %p188, %p189
    %p192 = scmp.ne.s32.totalorder %s175, %s191
    %p193 = scmp.eq.s32.totalorder %s21, 0
    %p194 = por %p192, %p193
    %s195 = ssub.s32 %s15, %s22
    %p196 = scmp.eq.s32.totalorder %s195, 0
    %s198 = sadd.s32 %s197, 1
    %s199 = scalar_select %p196, %s197, %s198
    %p202 = pneg %p196
    %p203 = scmp.eq.s32.totalorder %s15, 1
    %p204 = por %p202, %p203
    %p205 = scmp.ne.s32.totalorder %s197, %s200
    %p206 = scmp.eq.s32.totalorder %s15, 0
    %p207 = por %p205, %p206
    %p208 = scmp.ne.s32.totalorder %s197, %s200
    %p209 = scmp.eq.s32.totalorder %s20, 1
    %p210 = por %p208, %p209
    %p211 = scmp.ne.s32.totalorder %s200, %s201
    %p212 = scmp.eq.s32.totalorder %s20, 0
    %p213 = por %p211, %p212
    %p214 = scmp.ne.s32.totalorder %s200, %s201
    %p215 = scmp.eq.s32.totalorder %s21, 1
    %p216 = por %p214, %p215
    %p218 = scmp.ne.s32.totalorder %s201, %s217
    %p219 = scmp.eq.s32.totalorder %s21, 0
    %p220 = por %p218, %p219
    %s221 = ssub.s32 %s15, %s22
    %p222 = scmp.eq.s32.totalorder %s221, 0
    %s224 = sadd.s32 %s223, 1
    %s225 = scalar_select %p222, %s223, %s224
    %p228 = pneg %p222
    %p229 = scmp.eq.s32.totalorder %s15, 1
    %p230 = por %p228, %p229
    %p231 = scmp.ne.s32.totalorder %s223, %s226
    %p232 = scmp.eq.s32.totalorder %s15, 0
    %p233 = por %p231, %p232
    %p234 = scmp.ne.s32.totalorder %s223, %s226
    %p235 = scmp.eq.s32.totalorder %s20, 1
    %p236 = por %p234, %p235
    %p237 = scmp.ne.s32.totalorder %s226, %s227
    %p238 = scmp.eq.s32.totalorder %s20, 0
    %p239 = por %p237, %p238
    %p240 = scmp.ne.s32.totalorder %s226, %s227
    %p241 = scmp.eq.s32.totalorder %s21, 1
    %p242 = por %p240, %p241
    %p244 = scmp.ne.s32.totalorder %s227, %s243
    %p245 = scmp.eq.s32.totalorder %s21, 0
    %p246 = por %p244, %p245
    %s247 = ssub.s32 %s15, %s22
    %p248 = scmp.eq.s32.totalorder %s247, 0
    %s250 = sadd.s32 %s249, 1
    %s251 = scalar_select %p248, %s249, %s250
    %p254 = pneg %p248
    %p255 = scmp.eq.s32.totalorder %s15, 1
    %p256 = por %p254, %p255
    %p257 = scmp.ne.s32.totalorder %s249, %s252
    %p258 = scmp.eq.s32.totalorder %s15, 0
    %p259 = por %p257, %p258
    %p260 = scmp.ne.s32.totalorder %s249, %s252
    %p261 = scmp.eq.s32.totalorder %s20, 1
    %p262 = por %p260, %p261
    %p263 = scmp.ne.s32.totalorder %s252, %s253
    %p264 = scmp.eq.s32.totalorder %s20, 0
    %p265 = por %p263, %p264
    %p266 = scmp.ne.s32.totalorder %s252, %s253
    %p267 = scmp.eq.s32.totalorder %s21, 1
    %p268 = por %p266, %p267
    %p270 = scmp.ne.s32.totalorder %s253, %s269
    %p271 = scmp.eq.s32.totalorder %s21, 0
    %p272 = por %p270, %p271
    %p273 = scmp.le.s32.totalorder 1, %s15
    %p274 = scmp.lt.s32.totalorder %s15, 3
    %p275 = pnand %p273, %p274
    %p276 = pneg %p275
    // Predicated region
    $region9: #{softq_forward.1} parent=5 // pred_check
      _
    $region10: #{softq_forward.1} parent=5 // pred_check_branch
      %278 = sbr.rel (%p275) target = $region12
    $region11: #{softq_forward.1} parent=5 // pred_region
      %s279 = ssub.s32 %s15, 1
      // Predicated region
      $region13: #{softq_forward.1} parent=11 // pred_check
        %p280 = pneg %p36
      $region14: #{softq_forward.1} parent=11 // pred_check_branch
        %282 = sbr.rel (%p280) target = $region16
      $region15: #{softq_forward.1} parent=11 // pred_region
        _
      $region16: #{softq_forward.1} parent=11 // pred_fallthru
        _
      // Predicated region
      $region17: #{softq_forward.1} parent=11 // pred_check
        %p283 = pneg %p57
      $region18: #{softq_forward.1} parent=11 // pred_check_branch
        %285 = sbr.rel (%p283) target = $region20
      $region19: #{softq_forward.1} parent=11 // pred_region
        _
      $region20: #{softq_forward.1} parent=11 // pred_fallthru
        _
    $region12: #{softq_forward.1} parent=5 // pred_fallthru
      _
    %p286 = scmp.lt.s32.totalorder %s15, 2
    // Predicated region
    $region21: #{softq_forward.1} parent=5 // pred_check
      %p287 = pneg %p286
    $region22: #{softq_forward.1} parent=5 // pred_check_branch
      %289 = sbr.rel (%p287) target = $region24
    $region23: #{softq_forward.1} parent=5 // pred_region
      // Predicated region
      $region25: #{softq_forward.1} parent=23 // pred_check
        %p290 = pneg %p77
      $region26: #{softq_forward.1} parent=23 // pred_check_branch
        %292 = sbr.rel (%p290) target = $region28
      $region27: #{softq_forward.1} parent=23 // pred_region
        %p293 = scmp.lt.s32.totalorder %s15, 1
        %s294 = scalar_select %p293, %s15, 1
        %s295 = smul.addr %s294, 2
        %s296 = smul.addr %s295, 4
        %s297 = scalar_lea.vmem %s2, %s296
      $region28: #{softq_forward.1} parent=23 // pred_fallthru
        _
      // Predicated region
      $region29: #{softq_forward.1} parent=23 // pred_check
        %p298 = pneg %p103
      $region30: #{softq_forward.1} parent=23 // pred_check_branch
        %300 = sbr.rel (%p298) target = $region32
      $region31: #{softq_forward.1} parent=23 // pred_region
        %p301 = scmp.lt.s32.totalorder %s15, 1
        %s302 = scalar_select %p301, %s15, 1
        %s303 = smul.addr %s302, 2
        %s304 = scalar_lea.vmem %s3, %s303
      $region32: #{softq_forward.1} parent=23 // pred_fallthru
        _
      // Predicated region
      $region33: #{softq_forward.1} parent=23 // pred_check
        %p305 = pneg %p129
      $region34: #{softq_forward.1} parent=23 // pred_check_branch
        %307 = sbr.rel (%p305) target = $region36
      $region35: #{softq_forward.1} parent=23 // pred_region
        %p308 = scmp.lt.s32.totalorder %s15, 1
        %s309 = scalar_select %p308, %s15, 1
        %s310 = scalar_lea.vmem %s4, %s309
      $region36: #{softq_forward.1} parent=23 // pred_fallthru
        _
      // Predicated region
      $region37: #{softq_forward.1} parent=23 // pred_check
        %p311 = pneg %p155
      $region38: #{softq_forward.1} parent=23 // pred_check_branch
        %313 = sbr.rel (%p311) target = $region40
      $region39: #{softq_forward.1} parent=23 // pred_region
        %p314 = scmp.lt.s32.totalorder %s15, 1
        %s315 = scalar_select %p314, %s15, 1
        %s316 = smul.addr %s315, 16
        %s317 = smul.addr %s316, 4
        %s318 = scalar_lea.vmem %s5, %s317
      $region40: #{softq_forward.1} parent=23 // pred_fallthru
        _
      // Predicated region
      $region41: #{softq_forward.1} parent=23 // pred_check
        %p319 = pneg %p181
      $region42: #{softq_forward.1} parent=23 // pred_check_branch
        %321 = sbr.rel (%p319) target = $region44
      $region43: #{softq_forward.1} parent=23 // pred_region
        %p322 = scmp.lt.s32.totalorder %s15, 1
        %s323 = scalar_select %p322, %s15, 1
        %s324 = scalar_lea.vmem %s6, %s323
      $region44: #{softq_forward.1} parent=23 // pred_fallthru
        _
      // Predicated region
      $region45: #{softq_forward.1} parent=23 // pred_check
        %p325 = pneg %p207
      $region46: #{softq_forward.1} parent=23 // pred_check_branch
        %327 = sbr.rel (%p325) target = $region48
      $region47: #{softq_forward.1} parent=23 // pred_region
        %p328 = scmp.lt.s32.totalorder %s15, 1
        %s329 = scalar_select %p328, %s15, 1
        %s330 = smul.addr %s329, 16
        %s331 = smul.addr %s330, 4
        %s332 = scalar_lea.vmem %s7, %s331
      $region48: #{softq_forward.1} parent=23 // pred_fallthru
        _
      // Predicated region
      $region49: #{softq_forward.1} parent=23 // pred_check
        %p333 = pneg %p233
      $region50: #{softq_forward.1} parent=23 // pred_check_branch
        %335 = sbr.rel (%p333) target = $region52
      $region51: #{softq_forward.1} parent=23 // pred_region
        %p336 = scmp.lt.s32.totalorder %s15, 1
        %s337 = scalar_select %p336, %s15, 1
        %s338 = scalar_lea.vmem %s8, %s337
      $region52: #{softq_forward.1} parent=23 // pred_fallthru
        _
    $region24: #{softq_forward.1} parent=5 // pred_fallthru
      _
    %p339 = scmp.le.s32.totalorder 1, %s15
    %p340 = scmp.lt.s32.totalorder %s15, 3
    %p341 = pnand %p339, %p340
    %p342 = pneg %p341
    // Predicated region
    $region53: #{softq_forward.1} parent=5 // pred_check
      _
    $region54: #{softq_forward.1} parent=5 // pred_check_branch
      %344 = sbr.rel (%p341) target = $region56
    $region55: #{softq_forward.1} parent=5 // pred_region
      %s345 = ssub.s32 %s15, 1
      %p346 = pneg %p36
      %p347 = pneg %p33
      %p348 = pneg %p57
      %p349 = pneg %p54
      %p350 = scmp.lt.s32.totalorder %s20, 1
      %s351 = scalar_select %p350, %s20, 1
      %s352 = smul.addr %s351, 2
      %s353 = smul.addr %s352, 4
      %s354 = scalar_lea.vmem %s2, %s353
      %p355 = pneg %p83
      %p356 = pneg %p80
      %p357 = scmp.lt.s32.totalorder %s20, 1
      %s358 = scalar_select %p357, %s20, 1
      %s359 = smul.addr %s358, 2
      %s360 = scalar_lea.vmem %s3, %s359
      %p361 = pneg %p109
      %p362 = pneg %p106
      %p363 = scmp.lt.s32.totalorder %s20, 1
      %s364 = scalar_select %p363, %s20, 1
      %s365 = scalar_lea.vmem %s4, %s364
      %p366 = pneg %p135
      %p367 = pneg %p132
      %p368 = scmp.lt.s32.totalorder %s20, 1
      %s369 = scalar_select %p368, %s20, 1
      %s370 = smul.addr %s369, 16
      %s371 = smul.addr %s370, 4
      %s372 = scalar_lea.vmem %s5, %s371
      %p373 = pneg %p161
      %p374 = pneg %p158
      %p375 = scmp.lt.s32.totalorder %s20, 1
      %s376 = scalar_select %p375, %s20, 1
      %s377 = scalar_lea.vmem %s6, %s376
      %p378 = pneg %p187
      %p379 = pneg %p184
      %p380 = scmp.lt.s32.totalorder %s20, 1
      %s381 = scalar_select %p380, %s20, 1
      %s382 = smul.addr %s381, 16
      %s383 = smul.addr %s382, 4
      %s384 = scalar_lea.vmem %s7, %s383
      %p385 = pneg %p213
      %p386 = pneg %p210
      %p387 = scmp.lt.s32.totalorder %s20, 1
      %s388 = scalar_select %p387, %s20, 1
      %s389 = scalar_lea.vmem %s8, %s388
      %p390 = pneg %p239
      %p391 = pneg %p236
      %p392 = pneg %p265
      %p393 = pneg %p262
      %p394 = scmp.lt.s32.totalorder %s20, 1
      %s395 = scalar_select %p394, %s20, 1
      %s396 = smul.addr %s395, 4
      %s397 = scalar_lea.vmem %s9, %s396
      %p398 = scmp.lt.s32.totalorder %s20, 1
      %s399 = scalar_select %p398, %s20, 1
      %s400 = smul.addr %s399, 2
      %s401 = smul.addr %s400, 4
      %s402 = scalar_lea.vmem %s2, %s401
      %p403 = scmp.lt.s32.totalorder %s20, 1
      %s404 = scalar_select %p403, %s20, 1
      %s405 = smul.addr %s404, 2
      %s406 = scalar_lea.vmem %s3, %s405
      %p407 = scmp.lt.s32.totalorder %s20, 1
      %s408 = scalar_select %p407, %s20, 1
      %s409 = scalar_lea.vmem %s4, %s408
      %p410 = scmp.lt.s32.totalorder %s20, 1
      %s411 = scalar_select %p410, %s20, 1
      %s412 = smul.addr %s411, 16
      %s413 = smul.addr %s412, 4
      %s414 = scalar_lea.vmem %s5, %s413
      %p415 = scmp.lt.s32.totalorder %s20, 1
      %s416 = scalar_select %p415, %s20, 1
      %s417 = scalar_lea.vmem %s6, %s416
      %p418 = scmp.lt.s32.totalorder %s20, 1
      %s419 = scalar_select %p418, %s20, 1
      %s420 = smul.addr %s419, 16
      %s421 = smul.addr %s420, 4
      %s422 = scalar_lea.vmem %s7, %s421
      %p423 = scmp.lt.s32.totalorder %s20, 1
      %s424 = scalar_select %p423, %s20, 1
      %s425 = scalar_lea.vmem %s8, %s424
      %p426 = scmp.lt.s32.totalorder %s20, 1
      %s427 = scalar_select %p426, %s20, 1
      %s428 = smul.addr %s427, 4
      %s429 = scalar_lea.vmem %s9, %s428
      %v431 = vld [vmem:[%s0] sm:$0x3]
      %v432 = vld [vmem:[%s402] sm:$0xf]
      %v433 = vld [vmem:[%s402 + $0x4] sm:$0x3]
      %v434 = vld [vmem:[%s1] sm:$0x3]
      %v435 = vld [vmem:[%s406] sm:$0x3]
      %vm436 = vcmask 23552
      %v438 = vsel %vm436, %v434, 0
      %vm440 = vcmask 1040384
      %vm441 = vcmask 1041408
      %v442 = vsel %vm440, 4294967295, 65535
      %v443 = vsel %vm441, %v442, 0
      %v445 = vand.u32 %v435, %v443
      %447 = vmatprep.subr.bf16.mxu0 0
      %448 = vmatpush1.bf16.msra.mxu0 %v445
      %449 = vmatprep.subr.bf16.mxu0 0
      %450 = vmatpush1.bf16.msra.mxu0 0
      %451 = vmatprep.subr.bf16.mxu0 0
      %452 = vmatpush1.bf16.msra.mxu0 0
      %453 = vmatprep.subr.bf16.mxu0 0
      %454 = vmatpush1.bf16.msra.mxu0 0
      %455 = vmatprep.subr.bf16.mxu0 0
      %456 = vmatpush1.bf16.msra.mxu0 0
      %457 = vmatprep.subr.bf16.mxu0 0
      %458 = vmatpush1.bf16.msra.mxu0 0
      %459 = vmatprep.subr.bf16.mxu0 0
      %460 = vmatpush1.bf16.msra.mxu0 0
      %461 = vmatprep.subr.bf16.mxu0 0
      %462 = vmatpush1.bf16.msra.mxu0 0
      %463 = vmatprep.subr.bf16.mxu0 0
      %464 = vmatpush1.bf16.msra.mxu0 0
      %465 = vmatprep.subr.bf16.mxu0 0
      %466 = vmatpush1.bf16.msra.mxu0 0
      %467 = vmatprep.subr.bf16.mxu0 0
      %468 = vmatpush1.bf16.msra.mxu0 0
      %469 = vmatprep.subr.bf16.mxu0 0
      %470 = vmatpush1.bf16.msra.mxu0 0
      %471 = vmatprep.subr.bf16.mxu0 0
      %472 = vmatpush1.bf16.msra.mxu0 0
      %473 = vmatprep.subr.bf16.mxu0 0
      %474 = vmatpush1.bf16.msra.mxu0 0
      %475 = vmatprep.subr.bf16.mxu0 0
      %476 = vmatpush1.bf16.msra.mxu0 0
      %477 = vmatprep.subr.bf16.mxu0 0
      %478 = vmatpush1.bf16.msra.mxu0 0
      %479 = vmatprep.mubr.bf16.mxu0 0
      %480 = vmatmul.mubr.bf16.gmra.mrb[0].mxu0 %v438
      %v481 = vpop.f32.mrb[0].mxu0
      %v482 = vadd.f32 0.0, %v481
      %v483 = vpop.f32.mrb[0].mxu0
      %v484 = vpop.f32.mrb[0].mxu0
      %v485 = vpop.f32.mrb[0].mxu0
      %486 = vdwg.mxu0
      %v489 = vunpack.c.l.b16 %v432
      %v490 = vunpack.c.l.b16 %v433
      %v491 = vpack.c.b16 %v490, %v489
      %vm492 = vcmask 89088
      %v494 = vsel %vm492, %v431, 0
      %vm496 = vcmask 1044480
      %vm497 = vcmask 1045504
      %v498 = vsel %vm496, 4294967295, 65535
      %v499 = vsel %vm497, %v498, 0
      %v501 = vand.u32 %v491, %v499
      %503 = vmatprep.subr.bf16.mxu0 0
      %504 = vmatpush1.bf16.msra.mxu0 %v501
      %505 = vmatprep.subr.bf16.mxu0 0
      %506 = vmatpush1.bf16.msra.mxu0 0
      %507 = vmatprep.subr.bf16.mxu0 0
      %508 = vmatpush1.bf16.msra.mxu0 0
      %509 = vmatprep.subr.bf16.mxu0 0
      %510 = vmatpush1.bf16.msra.mxu0 0
      %511 = vmatprep.subr.bf16.mxu0 0
      %512 = vmatpush1.bf16.msra.mxu0 0
      %513 = vmatprep.subr.bf16.mxu0 0
      %514 = vmatpush1.bf16.msra.mxu0 0
      %515 = vmatprep.subr.bf16.mxu0 0
      %516 = vmatpush1.bf16.msra.mxu0 0
      %517 = vmatprep.subr.bf16.mxu0 0
      %518 = vmatpush1.bf16.msra.mxu0 0
      %519 = vmatprep.subr.bf16.mxu0 0
      %520 = vmatpush1.bf16.msra.mxu0 0
      %521 = vmatprep.subr.bf16.mxu0 0
      %522 = vmatpush1.bf16.msra.mxu0 0
      %523 = vmatprep.subr.bf16.mxu0 0
      %524 = vmatpush1.bf16.msra.mxu0 0
      %525 = vmatprep.subr.bf16.mxu0 0
      %526 = vmatpush1.bf16.msra.mxu0 0
      %527 = vmatprep.subr.bf16.mxu0 0
      %528 = vmatpush1.bf16.msra.mxu0 0
      %529 = vmatprep.subr.bf16.mxu0 0
      %530 = vmatpush1.bf16.msra.mxu0 0
      %531 = vmatprep.subr.bf16.mxu0 0
      %532 = vmatpush1.bf16.msra.mxu0 0
      %533 = vmatprep.subr.bf16.mxu0 0
      %534 = vmatpush1.bf16.msra.mxu0 0
      %535 = vmatprep.mubr.bf16.mxu0 0
      %536 = vmatmul.mubr.bf16.gmra.mrb[0].mxu0 %v494
      %v537 = vpop.f32.mrb[0].mxu0
      %v538 = vadd.f32 %v482, %v537
      %v539 = vpop.f32.mrb[0].mxu0
      %v540 = vpop.f32.mrb[0].mxu0
      %v541 = vpop.f32.mrb[0].mxu0
      %542 = vdwg.mxu0
      %v543 = vld [vmem:[%s409] sm:$0x1]
      %v545 = vlaneseq
      %v546 = vshrl.u32 %v545, 7
      %v547 = vsub.s32 0, %v546
      %v548 = vrot.slane %v543, %v547
      %v550 = vadd.f32 %v538, %v548
      %vm551 = vcmask 1043456
      %v552 = vsel %vm551, %v550, 0.0
      %553 = vadd.xlane.f32.xlu0 %v552
      %v554 = vpop.xlane.xlu0 %553
      %v555 = vrot.slane %v554, 4
      %v556 = vadd.f32 %v554, %v555
      %v557 = vrot.slane %v556, 2
      %v558 = vadd.f32 %v556, %v557
      %v559 = vrot.slane %v558, 1
      %v560 = vadd.f32 %v558, %v559
      %s561 = vtos %v560
      %v562 = vmul.f32 %v550, %v550
      %v563 = vsel %vm551, %v562, 0.0
      %564 = vadd.xlane.f32.xlu0 %v563
      %v565 = vpop.xlane.xlu0 %564
      %v566 = vrot.slane %v565, 4
      %v567 = vadd.f32 %v565, %v566
      %v568 = vrot.slane %v567, 2
      %v569 = vadd.f32 %v567, %v568
      %v570 = vrot.slane %v569, 1
      %v571 = vadd.f32 %v569, %v570
      %s572 = vtos %v571
      %v573 = vrcp.pop 512.0
      %s574 = vtos %v573
      %s575 = smul.f32 %s561, %s574
      %v576 = vrcp.pop 512.0
      %s577 = vtos %v576
      %s578 = smul.f32 %s572, %s577
      %s579 = smul.f32 %s575, %s575
      %s580 = ssub.f32 %s578, %s579
      %s581 = smax.f32 %s580, 0.0
      %v582 = vstv %s575
      %v583 = vsub.f32 %v550, %v582
      %s584 = sadd.f32 %s581, 1e-05
      %v585 = vstv %s584
      %v586 = vrsqrt.pop %v585
      %s587 = vtos %v586
      %v588 = vstv %s587
      %v589 = vmul.f32 %v583, %v588
      %vm590 = vcmp.gt.f32.partialorder %v589, 0.0
      %v591 = vmul.f32 %v589, 0.01
      %v592 = vsel %vm590, %v589, %v591
      %v593 = vpack.c.bf16 %v592, %v592
      %v594 = vld [vmem:[%s414] sm:$0xf]
      %v595 = vld [vmem:[%s414 + $0x4] sm:$0xf]
      %v596 = vld [vmem:[%s414 + $0x8] sm:$0xf]
      %v597 = vld [vmem:[%s414 + $0xc] sm:$0xf]
      %v598 = vld [vmem:[%s414 + $0x10] sm:$0xf]
      %v599 = vld [vmem:[%s414 + $0x14] sm:$0xf]
      %v600 = vld [vmem:[%s414 + $0x18] sm:$0xf]
      %v601 = vld [vmem:[%s414 + $0x1c] sm:$0xf]
      %v602 = vld [vmem:[%s414 + $0x20] sm:$0xf]
      %v603 = vld [vmem:[%s414 + $0x24] sm:$0xf]
      %v604 = vld [vmem:[%s414 + $0x28] sm:$0xf]
      %v605 = vld [vmem:[%s414 + $0x2c] sm:$0xf]
      %v606 = vld [vmem:[%s414 + $0x30] sm:$0xf]
      %v607 = vld [vmem:[%s414 + $0x34] sm:$0xf]
      %v608 = vld [vmem:[%s414 + $0x38] sm:$0xf]
      %v609 = vld [vmem:[%s414 + $0x3c] sm:$0xf]
      %v610 = vld [vmem:[%s417] sm:$0x1]
      %v612 = vlaneseq
      %v613 = vshrl.u32 %v612, 7
      %v614 = vsub.s32 0, %v613
      %v615 = vrot.slane %v610, %v614
      %v633 = vunpack.c.l.b16 %v594
      %v634 = vunpack.c.l.b16 %v595
      %v635 = vunpack.c.l.b16 %v596
      %v636 = vunpack.c.l.b16 %v597
      %v637 = vunpack.c.l.b16 %v598
      %v638 = vunpack.c.l.b16 %v599
      %v639 = vunpack.c.l.b16 %v600
      %v640 = vunpack.c.l.b16 %v601
      %v641 = vunpack.c.l.b16 %v602
      %v642 = vunpack.c.l.b16 %v603
      %v643 = vunpack.c.l.b16 %v604
      %v644 = vunpack.c.l.b16 %v605
      %v645 = vunpack.c.l.b16 %v606
      %v646 = vunpack.c.l.b16 %v607
      %v647 = vunpack.c.l.b16 %v608
      %v648 = vunpack.c.l.b16 %v609
      %v649 = vpack.c.b16 %v634, %v633
      %v650 = vpack.c.b16 %v636, %v635
      %v651 = vpack.c.b16 %v638, %v637
      %v652 = vpack.c.b16 %v640, %v639
      %v653 = vpack.c.b16 %v642, %v641
      %v654 = vpack.c.b16 %v644, %v643
      %v655 = vpack.c.b16 %v646, %v645
      %v656 = vpack.c.b16 %v648, %v647
      %665 = vmatprep.subr.bf16.mxu0 0
      %666 = vmatpush1.bf16.msra.mxu0 %v649
      %667 = vmatprep.subr.bf16.mxu0 0
      %668 = vmatpush1.bf16.msra.mxu0 %v650
      %669 = vmatprep.subr.bf16.mxu0 0
      %670 = vmatpush1.bf16.msra.mxu0 %v651
      %671 = vmatprep.subr.bf16.mxu0 0
      %672 = vmatpush1.bf16.msra.mxu0 %v652
      %673 = vmatprep.subr.bf16.mxu0 0
      %674 = vmatpush1.bf16.msra.mxu0 %v653
      %675 = vmatprep.subr.bf16.mxu0 0
      %676 = vmatpush1.bf16.msra.mxu0 %v654
      %677 = vmatprep.subr.bf16.mxu0 0
      %678 = vmatpush1.bf16.msra.mxu0 %v655
      %679 = vmatprep.subr.bf16.mxu0 0
      %680 = vmatpush1.bf16.msra.mxu0 %v656
      %681 = vmatprep.subr.bf16.mxu0 0
      %682 = vmatpush1.bf16.msra.mxu0 0
      %683 = vmatprep.subr.bf16.mxu0 0
      %684 = vmatpush1.bf16.msra.mxu0 0
      %685 = vmatprep.subr.bf16.mxu0 0
      %686 = vmatpush1.bf16.msra.mxu0 0
      %687 = vmatprep.subr.bf16.mxu0 0
      %688 = vmatpush1.bf16.msra.mxu0 0
      %689 = vmatprep.subr.bf16.mxu0 0
      %690 = vmatpush1.bf16.msra.mxu0 0
      %691 = vmatprep.subr.bf16.mxu0 0
      %692 = vmatpush1.bf16.msra.mxu0 0
      %693 = vmatprep.subr.bf16.mxu0 0
      %694 = vmatpush1.bf16.msra.mxu0 0
      %695 = vmatprep.subr.bf16.mxu0 0
      %696 = vmatpush1.bf16.msra.mxu0 0
      %697 = vmatprep.mubr.bf16.mxu0 0
      %698 = vmatmul.mubr.bf16.gmra.mrb[0].mxu0 %v593
      %v699 = vpop.f32.mrb[0].mxu0
      %v700 = vadd.f32 %v615, %v699
      %v701 = vpop.f32.mrb[0].mxu0
      %v702 = vpop.f32.mrb[0].mxu0
      %v703 = vpop.f32.mrb[0].mxu0
      %704 = vdwg.mxu0
      %v705 = vsel %vm551, %v700, 0.0
      %706 = vadd.xlane.f32.xlu0 %v705
      %v707 = vpop.xlane.xlu0 %706
      %v708 = vrot.slane %v707, 4
      %v709 = vadd.f32 %v707, %v708
      %v710 = vrot.slane %v709, 2
      %v711 = vadd.f32 %v709, %v710
      %v712 = vrot.slane %v711, 1
      %v713 = vadd.f32 %v711, %v712
      %s714 = vtos %v713
      %v715 = vmul.f32 %v700, %v700
      %v716 = vsel %vm551, %v715, 0.0
      %717 = vadd.xlane.f32.xlu0 %v716
      %v718 = vpop.xlane.xlu0 %717
      %v719 = vrot.slane %v718, 4
      %v720 = vadd.f32 %v718, %v719
      %v721 = vrot.slane %v720, 2
      %v722 = vadd.f32 %v720, %v721
      %v723 = vrot.slane %v722, 1
      %v724 = vadd.f32 %v722, %v723
      %s725 = vtos %v724
      %v726 = vrcp.pop 512.0
      %s727 = vtos %v726
      %s728 = smul.f32 %s714, %s727
      %v729 = vrcp.pop 512.0
      %s730 = vtos %v729
      %s731 = smul.f32 %s725, %s730
      %s732 = smul.f32 %s728, %s728
      %s733 = ssub.f32 %s731, %s732
      %s734 = smax.f32 %s733, 0.0
      %v735 = vstv %s728
      %v736 = vsub.f32 %v700, %v735
      %s737 = sadd.f32 %s734, 1e-05
      %v738 = vstv %s737
      %v739 = vrsqrt.pop %v738
      %s740 = vtos %v739
      %v741 = vstv %s740
      %v742 = vmul.f32 %v736, %v741
      %vm743 = vcmp.gt.f32.partialorder %v742, 0.0
      %v744 = vmul.f32 %v742, 0.01
      %v745 = vsel %vm743, %v742, %v744
      %v746 = vpack.c.bf16 %v745, %v745
      %v747 = vld [vmem:[%s422] sm:$0xf]
      %v748 = vld [vmem:[%s422 + $0x4] sm:$0xf]
      %v749 = vld [vmem:[%s422 + $0x8] sm:$0xf]
      %v750 = vld [vmem:[%s422 + $0xc] sm:$0xf]
      %v751 = vld [vmem:[%s422 + $0x10] sm:$0xf]
      %v752 = vld [vmem:[%s422 + $0x14] sm:$0xf]
      %v753 = vld [vmem:[%s422 + $0x18] sm:$0xf]
      %v754 = vld [vmem:[%s422 + $0x1c] sm:$0xf]
      %v755 = vld [vmem:[%s422 + $0x20] sm:$0xf]
      %v756 = vld [vmem:[%s422 + $0x24] sm:$0xf]
      %v757 = vld [vmem:[%s422 + $0x28] sm:$0xf]
      %v758 = vld [vmem:[%s422 + $0x2c] sm:$0xf]
      %v759 = vld [vmem:[%s422 + $0x30] sm:$0xf]
      %v760 = vld [vmem:[%s422 + $0x34] sm:$0xf]
      %v761 = vld [vmem:[%s422 + $0x38] sm:$0xf]
      %v762 = vld [vmem:[%s422 + $0x3c] sm:$0xf]
      %v763 = vld [vmem:[%s425] sm:$0x1]
      %v765 = vlaneseq
      %v766 = vshrl.u32 %v765, 7
      %v767 = vsub.s32 0, %v766
      %v768 = vrot.slane %v763, %v767
      %v786 = vunpack.c.l.b16 %v747
      %v787 = vunpack.c.l.b16 %v748
      %v788 = vunpack.c.l.b16 %v749
      %v789 = vunpack.c.l.b16 %v750
      %v790 = vunpack.c.l.b16 %v751
      %v791 = vunpack.c.l.b16 %v752
      %v792 = vunpack.c.l.b16 %v753
      %v793 = vunpack.c.l.b16 %v754
      %v794 = vunpack.c.l.b16 %v755
      %v795 = vunpack.c.l.b16 %v756
      %v796 = vunpack.c.l.b16 %v757
      %v797 = vunpack.c.l.b16 %v758
      %v798 = vunpack.c.l.b16 %v759
      %v799 = vunpack.c.l.b16 %v760
      %v800 = vunpack.c.l.b16 %v761
      %v801 = vunpack.c.l.b16 %v762
      %v802 = vpack.c.b16 %v787, %v786
      %v803 = vpack.c.b16 %v789, %v788
      %v804 = vpack.c.b16 %v791, %v790
      %v805 = vpack.c.b16 %v793, %v792
      %v806 = vpack.c.b16 %v795, %v794
      %v807 = vpack.c.b16 %v797, %v796
      %v808 = vpack.c.b16 %v799, %v798
      %v809 = vpack.c.b16 %v801, %v800
      %818 = vmatprep.subr.bf16.mxu0 0
      %819 = vmatpush1.bf16.msra.mxu0 %v802
      %820 = vmatprep.subr.bf16.mxu0 0
      %821 = vmatpush1.bf16.msra.mxu0 %v803
      %822 = vmatprep.subr.bf16.mxu0 0
      %823 = vmatpush1.bf16.msra.mxu0 %v804
      %824 = vmatprep.subr.bf16.mxu0 0
      %825 = vmatpush1.bf16.msra.mxu0 %v805
      %826 = vmatprep.subr.bf16.mxu0 0
      %827 = vmatpush1.bf16.msra.mxu0 %v806
      %828 = vmatprep.subr.bf16.mxu0 0
      %829 = vmatpush1.bf16.msra.mxu0 %v807
      %830 = vmatprep.subr.bf16.mxu0 0
      %831 = vmatpush1.bf16.msra.mxu0 %v808
      %832 = vmatprep.subr.bf16.mxu0 0
      %833 = vmatpush1.bf16.msra.mxu0 %v809
      %834 = vmatprep.subr.bf16.mxu0 0
      %835 = vmatpush1.bf16.msra.mxu0 0
      %836 = vmatprep.subr.bf16.mxu0 0
      %837 = vmatpush1.bf16.msra.mxu0 0
      %838 = vmatprep.subr.bf16.mxu0 0
      %839 = vmatpush1.bf16.msra.mxu0 0
      %840 = vmatprep.subr.bf16.mxu0 0
      %841 = vmatpush1.bf16.msra.mxu0 0
      %842 = vmatprep.subr.bf16.mxu0 0
      %843 = vmatpush1.bf16.msra.mxu0 0
      %844 = vmatprep.subr.bf16.mxu0 0
      %845 = vmatpush1.bf16.msra.mxu0 0
      %846 = vmatprep.subr.bf16.mxu0 0
      %847 = vmatpush1.bf16.msra.mxu0 0
      %848 = vmatprep.subr.bf16.mxu0 0
      %849 = vmatpush1.bf16.msra.mxu0 0
      %850 = vmatprep.mubr.bf16.mxu0 0
      %851 = vmatmul.mubr.bf16.gmra.mrb[0].mxu0 %v746
      %v852 = vpop.f32.mrb[0].mxu0
      %v853 = vadd.f32 %v768, %v852
      %v854 = vpop.f32.mrb[0].mxu0
      %v855 = vpop.f32.mrb[0].mxu0
      %v856 = vpop.f32.mrb[0].mxu0
      %857 = vdwg.mxu0
      %vm858 = vcmask 3072
      %859 = vst.msk [vmem:[%s429] sm:$0xf] %vm858, %v853
      %p860 = scmp.lt.s32.totalorder %s20, 1
      %s861 = scalar_select %p860, %s20, 1
      %s862 = smul.addr %s861, 4
      %s863 = scalar_lea.vmem %s9, %s862
      // Predicated region
      $region57: #{softq_forward.1} parent=55 // pred_check
        %p864 = pneg %p262
      $region58: #{softq_forward.1} parent=55 // pred_check_branch
        %866 = sbr.rel (%p864) target = $region60
      $region59: #{softq_forward.1} parent=55 // pred_region
        _
      $region60: #{softq_forward.1} parent=55 // pred_fallthru
        _
    $region56: #{softq_forward.1} parent=5 // pred_fallthru
      _
    %p867 = scmp.le.s32.totalorder 2, %s15
    // Predicated region
    $region61: #{softq_forward.1} parent=5 // pred_check
      %p868 = pneg %p867
    $region62: #{softq_forward.1} parent=5 // pred_check_branch
      %870 = sbr.rel (%p868) target = $region64
    $region63: #{softq_forward.1} parent=5 // pred_region
      %s871 = ssub.s32 %s15, 2
      // Predicated region
      $region65: #{softq_forward.1} parent=63 // pred_check
        %p872 = pneg %p268
      $region66: #{softq_forward.1} parent=63 // pred_check_branch
        %874 = sbr.rel (%p872) target = $region68
      $region67: #{softq_forward.1} parent=63 // pred_region
        %p875 = scmp.lt.s32.totalorder %s21, 1
        %s876 = scalar_select %p875, %s21, 1
        %s877 = smul.addr %s876, 4
        %s878 = scalar_lea.vmem %s9, %s877
      $region68: #{softq_forward.1} parent=63 // pred_fallthru
        _
    $region64: #{softq_forward.1} parent=5 // pred_fallthru
      _
  $region6: #{softq_forward.1} parent=0 // loop_footer
    %s19 = sadd.s32 1, %s15
  $region7: #{softq_forward.1} parent=0 // loop_footer_branch
    %14 = sbr.rel target = $region3
  $region8: #{softq_forward.1} parent=0 // loop_exit
    _

</llo_original>
